<compile_context>
chip_gen: v7x
topology: tpu7x:2x2x1
jax: 0.10.0
libtpu: 0.0.40
codegen_flags: <defaults>
</compile_context>

<pallas_src>
import functools
import math

import jax
import jax.numpy as jnp
from jax.experimental import pallas as pl
from jax.experimental.pallas import tpu as pltpu


def taylor_softmax_kernel(x_ref, o_ref, *, n):
    # x_ref block: (1, C, T)
    x = x_ref[...].astype(jnp.float32)

    # fn = 1 + x + x^2/2! + ... + x^n/n!   (Taylor expansion of exp)
    fn = jnp.ones_like(x)
    term = jnp.ones_like(x)
    denor = 1.0
    for i in range(1, n + 1):
        denor *= float(i)
        term = term * x                      # x^i via repeated multiply (VPU)
        fn = fn + term * (1.0 / denor)       # scale by precomputed 1/i!

    denom = jnp.sum(fn, axis=1, keepdims=True)      # (1, 1, T) channel sum
    inv = pl.reciprocal(denom, approx=False)         # one recip per column
    o_ref[...] = (fn * inv).astype(o_ref.dtype)       # broadcast multiply


def _pick_spatial_tile(m):
    # Largest lane-dense tile that evenly divides M; fall back to full M
    # (satisfies the (8,128)/full-dim BlockSpec rule either way).
    if m % 128 == 0:
        for t in (2048, 1024, 512, 256, 128):
            if m % t == 0:
                return t
    return m


@functools.partial(jax.jit, static_argnames=("dim", "n"))
def taylor_softmax(x, dim=1, n=2):
    assert n % 2 == 0
    orig_shape = x.shape
    dim = dim % x.ndim

    lead = math.prod(orig_shape[:dim])           # dims before the softmax axis
    c = orig_shape[dim]                          # softmax / reduction axis
    m = math.prod(orig_shape[dim + 1:])          # trailing dims -> lane axis
    x3 = x.reshape(lead, c, m)

    tile_m = _pick_spatial_tile(m)
    grid = (lead, m // tile_m)

    kernel = functools.partial(taylor_softmax_kernel, n=n)
    itemsize = jnp.dtype(x.dtype).itemsize
    out = pl.pallas_call(
        kernel,
        out_shape=jax.ShapeDtypeStruct((lead, c, m), x.dtype),
        grid=grid,
        in_specs=[pl.BlockSpec((1, c, tile_m), lambda i, j: (i, 0, j))],
        out_specs=pl.BlockSpec((1, c, tile_m), lambda i, j: (i, 0, j)),
        compiler_params=pltpu.CompilerParams(
            dimension_semantics=("parallel", "parallel")),
        cost_estimate=pl.CostEstimate(
            flops=int(lead * c * m * (3 * n + 2)),
            transcendentals=int(lead * m),
            bytes_accessed=int(2 * lead * c * m * itemsize)),
    )(x3)
    return out.reshape(orig_shape)


def taylor_softmax_ref(x, dim=1, n=2):
    # pure-JAX reference matching the PyTorch module
    fn = jnp.ones_like(x)
    denor = 1.0
    for i in range(1, n + 1):
        denor *= i
        fn = fn + x ** i / denor
    return fn / jnp.sum(fn, axis=dim, keepdims=True)


if __name__ == "__main__":
    key = jax.random.PRNGKey(0)
    x = jax.random.normal(key, (2, 4, 16, 16), dtype=jnp.float32)

    out = taylor_softmax(x, dim=1, n=2)
    jax.block_until_ready(out)

    ref = taylor_softmax_ref(x, dim=1, n=2)
    assert out.shape == x.shape
    assert jnp.allclose(out, ref, atol=1e-5, rtol=1e-5), (
        float(jnp.max(jnp.abs(out - ref))))
    print("KERNEL_OK")
</pallas_src>

<mosaic_0001>
module attributes {stable_mosaic.version = 11 : i64} {
  func.func @taylor_softmax_kernel(%arg0: i32, %arg1: i32, %arg2: memref<1x4x256xf32, #tpu.memory_space<vmem>>, %arg3: memref<1x4x256xf32, #tpu.memory_space<vmem>>) attributes {dimension_semantics = [#tpu.dimension_semantics<parallel>, #tpu.dimension_semantics<parallel>], iteration_bounds = array<i64: 2, 1>, scalar_prefetch = 0 : i64, scratch_operands = 0 : i64, tpu.core_type = #tpu.core_type<tc>, window_params = [{transform_indices = @transform_0, window_bounds = array<i64: 1, 4, 256>}, {transform_indices = @transform_1, window_bounds = array<i64: 1, 4, 256>}]} {
    %c0 = arith.constant 0 : index
    %c0_0 = arith.constant 0 : index
    %c0_1 = arith.constant 0 : index
    %0 = vector.load %arg2[%c0, %c0_0, %c0_1] : memref<1x4x256xf32, #tpu.memory_space<vmem>>, vector<1x4x256xf32>
    %cst = arith.constant 1.000000e+00 : f32
    %1 = vector.broadcast %cst : f32 to vector<1x4x256xf32>
    %cst_2 = arith.constant 1.000000e+00 : f32
    %2 = vector.broadcast %cst_2 : f32 to vector<1x4x256xf32>
    %3 = arith.mulf %2, %0 : vector<1x4x256xf32>
    %cst_3 = arith.constant 1.000000e+00 : f32
    %4 = vector.broadcast %cst_3 : f32 to vector<1x4x256xf32>
    %5 = arith.mulf %3, %4 : vector<1x4x256xf32>
    %6 = arith.addf %1, %5 : vector<1x4x256xf32>
    %7 = arith.mulf %3, %0 : vector<1x4x256xf32>
    %cst_4 = arith.constant 5.000000e-01 : f32
    %8 = vector.broadcast %cst_4 : f32 to vector<1x4x256xf32>
    %9 = arith.mulf %7, %8 : vector<1x4x256xf32>
    %10 = arith.addf %6, %9 : vector<1x4x256xf32>
    %cst_5 = arith.constant dense<0.000000e+00> : vector<1x256xf32>
    %11 = vector.multi_reduction <add>, %10, %cst_5 [1] : vector<1x4x256xf32> to vector<1x256xf32>
    %12 = vector.shape_cast %11 : vector<1x256xf32> to vector<1x1x256xf32>
    %13 = tpu.reciprocal %12 : vector<1x1x256xf32> -> vector<1x1x256xf32>
    %14 = vector.broadcast %13 : vector<1x1x256xf32> to vector<1x4x256xf32>
    %15 = arith.mulf %10, %14 : vector<1x4x256xf32>
    %c0_6 = arith.constant 0 : index
    %c0_7 = arith.constant 0 : index
    %c0_8 = arith.constant 0 : index
    %16 = vector.load %arg3[%c0_6, %c0_7, %c0_8] : memref<1x4x256xf32, #tpu.memory_space<vmem>>, vector<1x4x256xf32>
    tpu.vector_store %arg3[%c0_6, %c0_7, %c0_8], %15 {strides = array<i32>} : memref<1x4x256xf32, #tpu.memory_space<vmem>>, vector<1x4x256xf32>,
    return
  }
  func.func @transform_0(%arg0: i32, %arg1: i32) -> (i32, i32, i32) {
    %c0_i32 = arith.constant 0 : i32
    %c0_i32_0 = arith.constant 0 : i32
    return %arg0, %c0_i32, %arg1 : i32, i32, i32
  }
  func.func @transform_1(%arg0: i32, %arg1: i32) -> (i32, i32, i32) {
    %c0_i32 = arith.constant 0 : i32
    %c0_i32_0 = arith.constant 0 : i32
    return %arg0, %c0_i32, %arg1 : i32, i32, i32
  }
}

</mosaic_0001>

<llo_original>
// kernel: taylor_softmax.1
$region0: #{taylor_softmax.1}
  #allocation0 [shape = 'u32[]', space=smem, size = 0x4, offset = 0x4, fixed_abs, tag = 'smem constant byte address 0x4 - core index']
  #allocation1 [shape = 'u32[144,128]{1,0:T(1,128)}', space=vmem, size = 0x12000, scoped, tag = 'internal scratch']
  %s0 = inlined_call_operand.vmem [shape: f32[2,4,256], index: 0, kind: input, shape index: {}]
  %s1 = inlined_call_operand.vmem [shape: f32[2,4,256], index: 1, kind: output, shape index: {}]
  %s2 = sld [smem:[#allocation0]]
  $region37: #{taylor_softmax.1} parent=0
    _
  %s4 = ssub.s32 1, %s2
  %s5 = scalar_select 0, %s4, %s2
  loop: start=0, step=1, limit=4
  $region2: #{taylor_softmax.1} parent=0 // loop_pre_header
    _
  $region3: #{taylor_softmax.1} parent=0 // loop_header
    %s7 = sphi 0, %s11
    %p8 = scmp.ge.s32.totalorder %s7, 4
    %s14 = sphi 0, %s26
    %s15 = sphi 0, %s22
    %s16 = sphi 0, %s14
    %s17 = sphi 0, %s15
    %s18 = sphi 0, %s16
    %s19 = sphi 0, %s17
    %s31 = sphi 0, %s33
    %s34 = sphi 0, %s31
    %s35 = sphi 0, %s34
    %s51 = sphi 0, %s35
    %s59 = sphi 0, %s61
    %s62 = sphi 0, %s59
    %s63 = sphi 0, %s62
    %s79 = sphi 0, %s63
  $region4: #{taylor_softmax.1} parent=0 // loop_header_branch
    %10 = sbr.rel (%p8) target = $region8
  $region5: #{taylor_softmax.1} parent=0 // loop_body
    %s12 = ssub.s32 %s7, 1
    %s13 = ssub.s32 %s7, 2
    %s20 = sadd.s32 1, %s15
    %p21 = scmp.ge.s32.totalorder %s20, 1
    %s22 = scalar_select %p21, 0, %s20
    %s23 = sadd.s32 1, %s14
    %s24 = scalar_select %p21, %s23, %s14
    %p25 = scmp.ge.s32.totalorder %s24, 2
    %s26 = scalar_select %p25, 0, %s24
    %s27 = ssub.s32 %s14, %s26
    %s28 = ssub.s32 %s15, %s22
    %s29 = sor.u32 %s27, %s28
    %p30 = scmp.eq.s32.totalorder %s29, 0
    %s32 = sadd.s32 %s31, 1
    %s33 = scalar_select %p30, %s31, %s32
    %p36 = pneg %p30
    %p37 = scmp.eq.s32.totalorder %s7, 1
    %p38 = por %p36, %p37
    %p39 = scmp.ne.s32.totalorder %s31, %s34
    %p40 = scmp.eq.s32.totalorder %s7, 0
    %p41 = por %p39, %p40
    %p42 = scmp.ne.s32.totalorder %s31, %s34
    %p43 = scmp.eq.s32.totalorder %s12, 1
    %p44 = por %p42, %p43
    %p45 = scmp.ne.s32.totalorder %s34, %s35
    %p46 = scmp.eq.s32.totalorder %s12, 0
    %p47 = por %p45, %p46
    %p48 = scmp.ne.s32.totalorder %s34, %s35
    %p49 = scmp.eq.s32.totalorder %s13, 1
    %p50 = por %p48, %p49
    %p52 = scmp.ne.s32.totalorder %s35, %s51
    %p53 = scmp.eq.s32.totalorder %s13, 0
    %p54 = por %p52, %p53
    %s55 = ssub.s32 %s14, %s26
    %s56 = ssub.s32 %s15, %s22
    %s57 = sor.u32 %s55, %s56
    %p58 = scmp.eq.s32.totalorder %s57, 0
    %s60 = sadd.s32 %s59, 1
    %s61 = scalar_select %p58, %s59, %s60
    %p64 = pneg %p58
    %p65 = scmp.eq.s32.totalorder %s7, 1
    %p66 = por %p64, %p65
    %p67 = scmp.ne.s32.totalorder %s59, %s62
    %p68 = scmp.eq.s32.totalorder %s7, 0
    %p69 = por %p67, %p68
    %p70 = scmp.ne.s32.totalorder %s59, %s62
    %p71 = scmp.eq.s32.totalorder %s12, 1
    %p72 = por %p70, %p71
    %p73 = scmp.ne.s32.totalorder %s62, %s63
    %p74 = scmp.eq.s32.totalorder %s12, 0
    %p75 = por %p73, %p74
    %p76 = scmp.ne.s32.totalorder %s62, %s63
    %p77 = scmp.eq.s32.totalorder %s13, 1
    %p78 = por %p76, %p77
    %p80 = scmp.ne.s32.totalorder %s63, %s79
    %p81 = scmp.eq.s32.totalorder %s13, 0
    %p82 = por %p80, %p81
    %p83 = scmp.le.s32.totalorder 1, %s7
    %p84 = scmp.lt.s32.totalorder %s7, 3
    %p85 = pnand %p83, %p84
    %p86 = pneg %p85
    // Predicated region
    $region9: #{taylor_softmax.1} parent=5 // pred_check
      _
    $region10: #{taylor_softmax.1} parent=5 // pred_check_branch
      %88 = sbr.rel (%p85) target = $region12
    $region11: #{taylor_softmax.1} parent=5 // pred_region
      %s89 = ssub.s32 %s7, 1
    $region12: #{taylor_softmax.1} parent=5 // pred_fallthru
      _
    %p90 = scmp.lt.s32.totalorder %s7, 2
    // Predicated region
    $region13: #{taylor_softmax.1} parent=5 // pred_check
      %p91 = pneg %p90
    $region14: #{taylor_softmax.1} parent=5 // pred_check_branch
      %93 = sbr.rel (%p91) target = $region16
    $region15: #{taylor_softmax.1} parent=5 // pred_region
      // Predicated region
      $region17: #{taylor_softmax.1} parent=15 // pred_check
        %p94 = pneg %p41
      $region18: #{taylor_softmax.1} parent=15 // pred_check_branch
        %96 = sbr.rel (%p94) target = $region20
      $region19: #{taylor_softmax.1} parent=15 // pred_region
        %s97 = smul.u32 2, %s15
        %p98 = scmp.lt.s32.totalorder %s14, 1
        %s99 = scalar_select %p98, %s14, 1
        %p100 = scmp.lt.s32.totalorder %s97, 1
        %s101 = scalar_select %p100, %s97, 1
        %s102 = smul.addr %s99, 2
        %s103 = sadd.s32 %s101, %s102
        %s104 = smul.addr %s103, 4
        %s105 = scalar_lea.vmem %s0, %s104
        %s106 = smul.u32 2, %s15
      $region20: #{taylor_softmax.1} parent=15 // pred_fallthru
        _
    $region16: #{taylor_softmax.1} parent=5 // pred_fallthru
      _
    %p107 = scmp.le.s32.totalorder 1, %s7
    %p108 = scmp.lt.s32.totalorder %s7, 3
    %p109 = pnand %p107, %p108
    %p110 = pneg %p109
    // Predicated region
    $region21: #{taylor_softmax.1} parent=5 // pred_check
      _
    $region22: #{taylor_softmax.1} parent=5 // pred_check_branch
      %112 = sbr.rel (%p109) target = $region24
    $region23: #{taylor_softmax.1} parent=5 // pred_region
      %s113 = ssub.s32 %s7, 1
      %s114 = smul.u32 2, %s17
      %p115 = scmp.lt.s32.totalorder %s16, 1
      %s116 = scalar_select %p115, %s16, 1
      %p117 = scmp.lt.s32.totalorder %s114, 1
      %s118 = scalar_select %p117, %s114, 1
      %s119 = smul.addr %s116, 2
      %s120 = sadd.s32 %s118, %s119
      %s121 = smul.addr %s120, 4
      %s122 = scalar_lea.vmem %s0, %s121
      %p123 = pneg %p47
      %p124 = pneg %p44
      %p125 = pneg %p75
      %p126 = pneg %p72
      %s127 = smul.u32 2, %s17
      %p128 = scmp.lt.s32.totalorder %s16, 1
      %s129 = scalar_select %p128, %s16, 1
      %p130 = scmp.lt.s32.totalorder %s127, 1
      %s131 = scalar_select %p130, %s127, 1
      %s132 = smul.addr %s129, 2
      %s133 = sadd.s32 %s131, %s132
      %s134 = smul.addr %s133, 4
      %s135 = scalar_lea.vmem %s1, %s134
      %s136 = smul.u32 2, %s17
      %p137 = scmp.lt.s32.totalorder %s16, 1
      %s138 = scalar_select %p137, %s16, 1
      %p139 = scmp.lt.s32.totalorder %s136, 1
      %s140 = scalar_select %p139, %s136, 1
      %s141 = smul.addr %s138, 2
      %s142 = sadd.s32 %s140, %s141
      %s143 = smul.addr %s142, 4
      %s144 = scalar_lea.vmem %s0, %s143
      %s145 = smul.u32 2, %s17
      %s146 = smul.u32 2, %s17
      %p147 = scmp.lt.s32.totalorder %s16, 1
      %s148 = scalar_select %p147, %s16, 1
      %p149 = scmp.lt.s32.totalorder %s146, 1
      %s150 = scalar_select %p149, %s146, 1
      %s151 = smul.addr %s148, 2
      %s152 = sadd.s32 %s150, %s151
      %s153 = smul.addr %s152, 4
      %s154 = scalar_lea.vmem %s1, %s153
      %s155 = smul.u32 2, %s17
      %v156 = vld [vmem:[%s144] sm:$0xff]
      %v157 = vadd.f32 %v156, 1.0
      %v158 = vmul.f32 %v156, %v156
      %v159 = vmul.f32 %v158, 0.5
      %v160 = vadd.f32 %v157, %v159
      %v162 = vcombine.high %v160, %v160
      %vm164 = vcmask 1043456
      %v165 = vsel %vm164, %v160, 0.0
      %v166 = vrot.slane %v165, 4
      %v167 = vadd.f32 %v165, %v166
      %v168 = vrot.slane %v167, 2
      %v169 = vadd.f32 %v167, %v168
      %v170 = vrot.slane %v169, 1
      %v171 = vadd.f32 %v169, %v170
      %v172 = vsel %vm164, %v162, 0.0
      %v173 = vrot.slane %v172, 4
      %v174 = vadd.f32 %v172, %v173
      %v175 = vrot.slane %v174, 2
      %v176 = vadd.f32 %v174, %v175
      %v177 = vrot.slane %v176, 1
      %v178 = vadd.f32 %v176, %v177
      %v179 = vrcp.pop %v171
      %v180 = vrcp.pop %v178
      %v183 = vcombine.low %v179, %v180
      %v185 = vmul.f32 %v160, %v183
      %186 = vst [vmem:[%s154] sm:$0xff] %v185
      %s187 = smul.u32 2, %s17
      %p188 = scmp.lt.s32.totalorder %s16, 1
      %s189 = scalar_select %p188, %s16, 1
      %p190 = scmp.lt.s32.totalorder %s187, 1
      %s191 = scalar_select %p190, %s187, 1
      %s192 = smul.addr %s189, 2
      %s193 = sadd.s32 %s191, %s192
      %s194 = smul.addr %s193, 4
      %s195 = scalar_lea.vmem %s1, %s194
      // Predicated region
      $region25: #{taylor_softmax.1} parent=23 // pred_check
        %p196 = pneg %p72
      $region26: #{taylor_softmax.1} parent=23 // pred_check_branch
        %198 = sbr.rel (%p196) target = $region28
      $region27: #{taylor_softmax.1} parent=23 // pred_region
        %s199 = smul.u32 2, %s17
      $region28: #{taylor_softmax.1} parent=23 // pred_fallthru
        _
    $region24: #{taylor_softmax.1} parent=5 // pred_fallthru
      _
    %p200 = scmp.le.s32.totalorder 2, %s7
    // Predicated region
    $region29: #{taylor_softmax.1} parent=5 // pred_check
      %p201 = pneg %p200
    $region30: #{taylor_softmax.1} parent=5 // pred_check_branch
      %203 = sbr.rel (%p201) target = $region32
    $region31: #{taylor_softmax.1} parent=5 // pred_region
      %s204 = ssub.s32 %s7, 2
      // Predicated region
      $region33: #{taylor_softmax.1} parent=31 // pred_check
        %p205 = pneg %p78
      $region34: #{taylor_softmax.1} parent=31 // pred_check_branch
        %207 = sbr.rel (%p205) target = $region36
      $region35: #{taylor_softmax.1} parent=31 // pred_region
        %s208 = smul.u32 2, %s19
        %p209 = scmp.lt.s32.totalorder %s18, 1
        %s210 = scalar_select %p209, %s18, 1
        %p211 = scmp.lt.s32.totalorder %s208, 1
        %s212 = scalar_select %p211, %s208, 1
        %s213 = smul.addr %s210, 2
        %s214 = sadd.s32 %s212, %s213
        %s215 = smul.addr %s214, 4
        %s216 = scalar_lea.vmem %s1, %s215
      $region36: #{taylor_softmax.1} parent=31 // pred_fallthru
        _
    $region32: #{taylor_softmax.1} parent=5 // pred_fallthru
      _
  $region6: #{taylor_softmax.1} parent=0 // loop_footer
    %s11 = sadd.s32 1, %s7
  $region7: #{taylor_softmax.1} parent=0 // loop_footer_branch
    %6 = sbr.rel target = $region3
  $region8: #{taylor_softmax.1} parent=0 // loop_exit
    _

</llo_original>
